<compile_context>
chip_gen: v5e
topology: v5e:2x2
jax: 0.10.0
libtpu: 0.0.40
codegen_flags: <defaults>
</compile_context>

<pallas_src>
import functools

import jax
import jax.numpy as jnp
from jax import lax
from jax.experimental import pallas as pl
from jax.experimental.pallas import tpu as pltpu

SMOOTH = 1e-5
LANE = 128


def _round_up(x, m):
    return (x + m - 1) // m * m


def _cdiv(a, b):
    return (a + b - 1) // b


def _pdl_kernel(inp_ref, lbl_ref, out_ref, *, n_classes, ignore_index, ts,
                n_valid, needs_mask):
    """One row-tile: emit per-class lane-partial (intersect, y_sum, z_sum).

    inp_ref: (B, C, TS, 128) scores tile (native dtype, upcast here)
    lbl_ref: (B, TS, 128)    labels tile
    out_ref: (1, 3, C, 128)  lane partials; tiles+lanes summed in the wrapper
    """
    lbl = lbl_ref[...]                                  # (B, TS, 128) int
    keep = lbl != ignore_index                          # class-invariant

    if needs_mask:
        # Ragged last tile: rows past the true N are unspecified (OOB block
        # reads).  Zero the mask AND the scores there (0 * NaN would be NaN).
        n = pl.program_id(0)
        row = lax.broadcasted_iota(jnp.int32, (ts, LANE), 0)
        col = lax.broadcasted_iota(jnp.int32, (ts, LANE), 1)
        flat = n * (ts * LANE) + row * LANE + col
        valid = jnp.broadcast_to((flat < n_valid)[None], lbl.shape)
        keep = jnp.logical_and(keep, valid)

    mask = keep.astype(jnp.float32)                     # (B, TS, 128)
    # PyTorch broadcast quirk (see header): factor out sum_b mask, hoisted.
    m_b = jnp.broadcast_to(jnp.sum(mask, axis=0, keepdims=True), mask.shape)

    for c in range(n_classes):                          # small, unrolled
        s = inp_ref[:, c].astype(jnp.float32)           # (B, TS, 128), free slice
        if needs_mask:
            s = jnp.where(valid, s, 0.0)                # NaN-safe tail
        eq = lbl == c
        sm = s * m_b                                    # shared class factor
        out_ref[0, 0, c, :] = jnp.sum(jnp.where(eq, sm, 0.0), axis=(0, 1))   # intersect
        out_ref[0, 1, c, :] = jnp.sum(jnp.where(eq, m_b, 0.0), axis=(0, 1))  # y_sum (t*t == t)
        out_ref[0, 2, c, :] = jnp.sum(s * sm, axis=(0, 1))                   # z_sum


def pdl_loss(inputs, target, n_classes, ignore_index, weight=None,
             tile_budget_bytes=10 * 1024 * 1024):
    """inputs: (B, C, H, W) probabilities; target: (B, 1, H, W) integer labels."""
    B, C, H, W = inputs.shape
    assert C == n_classes, "predict & target shape do not match"
    assert target.shape == (B, 1, H, W)
    N = H * W

    inp = inputs.reshape(B, C, N)                # free reshape, keep native dtype
    lbl = target.reshape(B, N)
    if not jnp.issubdtype(lbl.dtype, jnp.integer):
        lbl = lbl.astype(jnp.int32)

    # Lane pad only when N % 128 != 0 (required for the (rows, 128) layout);
    # padded labels = ignore_index / scores = 0 contribute exactly zero.
    n128 = _round_up(N, LANE)
    if n128 != N:
        inp = jnp.pad(inp, ((0, 0), (0, 0), (0, n128 - N)))
        lbl = jnp.pad(lbl, ((0, 0), (0, n128 - N)), constant_values=ignore_index)
    rows = n128 // LANE
    inp = inp.reshape(B, C, rows, LANE)
    lbl = lbl.reshape(B, rows, LANE)

    # --- tile size (in sublane rows): big tiles, bounded for v7x 64 MiB VMEM --
    per_row_bytes = (B * C * jnp.dtype(inp.dtype).itemsize
                     + B * jnp.dtype(lbl.dtype).itemsize) * LANE
    ts = max(8, (tile_budget_bytes // per_row_bytes) // 8 * 8)
    if rows <= 8:
        ts = rows                                     # one tile == full dim (legal)
    else:
        ts = min(ts, _round_up(_cdiv(rows, 2), 8))    # >= 2 tiles (v7x: 2 TCs)
    num_tiles = _cdiv(rows, ts)
    needs_mask = (rows % ts) != 0                     # ragged last tile only

    kernel = functools.partial(
        _pdl_kernel, n_classes=n_classes, ignore_index=ignore_index,
        ts=ts, n_valid=N, needs_mask=needs_mask)

    partials = pl.pallas_call(
        kernel,
        out_shape=jax.ShapeDtypeStruct((num_tiles, 3, n_classes, LANE),
                                       jnp.float32),
        grid_spec=pltpu.PrefetchScalarGridSpec(
            num_scalar_prefetch=0,
            grid=(num_tiles,),
            in_specs=[
                pl.BlockSpec((B, C, ts, LANE), lambda n: (0, 0, n, 0)),  # scores
                pl.BlockSpec((B, ts, LANE), lambda n: (0, n, 0)),        # labels
            ],
            out_specs=pl.BlockSpec((1, 3, n_classes, LANE),
                                   lambda n: (n, 0, 0, 0)),
        ),
        compiler_params=pltpu.CompilerParams(
            dimension_semantics=("parallel",),     # independent per tile
            vmem_limit_bytes=48 * 1024 * 1024,     # fits v5e/v6e/v7x physical
        ),
    )(inp, lbl)

    # --- finish dice + weighted mean in plain JAX (tiny) ----------------------
    sums = jnp.sum(partials, axis=(0, 3))          # (3, C)
    intersect, y_sum, z_sum = sums[0], sums[1], sums[2]
    if weight is None:
        weight = [1.0] * n_classes
    w = jnp.asarray(weight, dtype=jnp.float32)
    dice = 1.0 - (2.0 * intersect + SMOOTH) / (z_sum + y_sum + SMOOTH)
    return jnp.sum(dice * w) / n_classes


def pdl_loss_ref(inputs, target, n_classes, ignore_index, weight=None):
    """Pure-JAX transcription of the PyTorch forward (incl. broadcast quirk)."""
    ignore_mask = (target != ignore_index).astype(jnp.float32)  # (B,1,H,W)
    if weight is None:
        weight = [1.0] * n_classes
    loss = 0.0
    for i in range(n_classes):
        s = inputs[:, i]                                    # (B,H,W)
        t = (target[:, 0] == i).astype(jnp.float32)         # (B,H,W)
        intersect = jnp.sum(s * t * ignore_mask)            # -> (B,B,H,W) sum
        y_sum = jnp.sum(t * t * ignore_mask)
        z_sum = jnp.sum(s * s * ignore_mask)
        dice = 1.0 - (2.0 * intersect + SMOOTH) / (z_sum + y_sum + SMOOTH)
        loss = loss + dice * weight[i]
    return loss / n_classes


if __name__ == "__main__":
    key = jax.random.PRNGKey(0)
    ignore_index = 255

    def make_case(k, B, C, H, W, p_ignore):
        k1, k2, k3 = jax.random.split(k, 3)
        logits = jax.random.normal(k1, (B, C, H, W), dtype=jnp.float32)
        probs = jax.nn.softmax(logits, axis=1)
        labels = jax.random.randint(k2, (B, 1, H, W), 0, C, dtype=jnp.int32)
        ign = jax.random.bernoulli(k3, p_ignore, (B, 1, H, W))
        labels = jnp.where(ign, ignore_index, labels).astype(jnp.int32)
        return probs, labels

    k1, k2, k3 = jax.random.split(key, 3)

    # test 1: basic shapes, no weights (single tile, no padding/masking)
    x1, y1 = make_case(k1, 2, 4, 16, 16, 0.1)
    out1 = jax.block_until_ready(pdl_loss(x1, y1, 4, ignore_index))
    ref1 = pdl_loss_ref(x1, y1, 4, ignore_index)
    assert jnp.allclose(out1, ref1, rtol=1e-4, atol=1e-5), (out1, ref1)

    # test 2: non-128-divisible N (lane pad) + class weights
    wts = [1.0, 2.0, 0.5]
    x2, y2 = make_case(k2, 2, 3, 13, 13, 0.2)
    out2 = jax.block_until_ready(pdl_loss(x2, y2, 3, ignore_index, weight=wts))
    ref2 = pdl_loss_ref(x2, y2, 3, ignore_index, weight=wts)
    assert jnp.allclose(out2, ref2, rtol=1e-4, atol=1e-5), (out2, ref2)

    # test 3: rows not divisible by tile (exercises ragged-tile in-kernel mask)
    x3, y3 = make_case(k3, 2, 4, 48, 48, 0.15)   # N=2304 -> 18 rows, ts=16
    out3 = jax.block_until_ready(pdl_loss(x3, y3, 4, ignore_index))
    ref3 = pdl_loss_ref(x3, y3, 4, ignore_index)
    assert jnp.allclose(out3, ref3, rtol=1e-4, atol=1e-5), (out3, ref3)

    print("KERNEL_OK")
</pallas_src>

<mosaic_0001>
module attributes {stable_mosaic.version = 11 : i64} {
  func.func @_pdl_kernel(%arg0: i32, %arg1: memref<2x4x2x128xf32, #tpu.memory_space<vmem>>, %arg2: memref<2x2x128xi32, #tpu.memory_space<vmem>>, %arg3: memref<1x3x4x128xf32, #tpu.memory_space<vmem>>) attributes {dimension_semantics = [#tpu.dimension_semantics<parallel>], iteration_bounds = array<i64: 1>, scalar_prefetch = 0 : i64, scratch_operands = 0 : i64, tpu.core_type = #tpu.core_type<tc>, window_params = [{transform_indices = @transform_0, window_bounds = array<i64: 2, 4, 2, 128>}, {transform_indices = @transform_1, window_bounds = array<i64: 2, 2, 128>}, {transform_indices = @transform_2, window_bounds = array<i64: 1, 3, 4, 128>}]} {
    %c0 = arith.constant 0 : index
    %c0_0 = arith.constant 0 : index
    %c0_1 = arith.constant 0 : index
    %0 = vector.load %arg2[%c0, %c0_0, %c0_1] : memref<2x2x128xi32, #tpu.memory_space<vmem>>, vector<2x2x128xi32>
    %c255_i32 = arith.constant 255 : i32
    %1 = vector.broadcast %c255_i32 : i32 to vector<2x2x128xi32>
    %2 = arith.cmpi ne, %0, %1 : vector<2x2x128xi32>
    %3 = arith.extui %2 : vector<2x2x128xi1> to vector<2x2x128xi32>
    %4 = arith.sitofp %3 : vector<2x2x128xi32> to vector<2x2x128xf32>
    %cst = arith.constant dense<0.000000e+00> : vector<2x128xf32>
    %5 = vector.multi_reduction <add>, %4, %cst [0] : vector<2x2x128xf32> to vector<2x128xf32>
    %6 = vector.shape_cast %5 : vector<2x128xf32> to vector<1x2x128xf32>
    %7 = vector.shape_cast %6 : vector<1x2x128xf32> to vector<1x2x128xf32>
    %8 = vector.broadcast %7 : vector<1x2x128xf32> to vector<2x2x128xf32>
    %c0_2 = arith.constant 0 : index
    %c0_3 = arith.constant 0 : index
    %c0_4 = arith.constant 0 : index
    %c0_5 = arith.constant 0 : index
    %9 = vector.load %arg1[%c0_2, %c0_3, %c0_4, %c0_5] : memref<2x4x2x128xf32, #tpu.memory_space<vmem>>, vector<2x1x2x128xf32>
    %10 = vector.shape_cast %9 : vector<2x1x2x128xf32> to vector<2x2x128xf32>
    %c0_i32 = arith.constant 0 : i32
    %11 = vector.broadcast %c0_i32 : i32 to vector<2x2x128xi32>
    %12 = arith.cmpi eq, %0, %11 : vector<2x2x128xi32>
    %13 = arith.mulf %10, %8 : vector<2x2x128xf32>
    %cst_6 = arith.constant 0.000000e+00 : f32
    %14 = vector.broadcast %cst_6 : f32 to vector<2x2x128xf32>
    %15 = arith.select %12, %13, %14 : vector<2x2x128xi1>, vector<2x2x128xf32>
    %cst_7 = arith.constant dense<0.000000e+00> : vector<128xf32>
    %16 = vector.multi_reduction <add>, %15, %cst_7 [0, 1] : vector<2x2x128xf32> to vector<128xf32>
    %c0_8 = arith.constant 0 : index
    %c0_9 = arith.constant 0 : index
    %c0_10 = arith.constant 0 : index
    %c0_11 = arith.constant 0 : index
    %17 = vector.load %arg3[%c0_8, %c0_9, %c0_10, %c0_11] : memref<1x3x4x128xf32, #tpu.memory_space<vmem>>, vector<1x1x1x128xf32>
    %18 = vector.shape_cast %17 : vector<1x1x1x128xf32> to vector<128xf32>
    %19 = vector.shape_cast %16 : vector<128xf32> to vector<1x1x1x128xf32>
    tpu.vector_store %arg3[%c0_8, %c0_9, %c0_10, %c0_11], %19 {strides = array<i32>} : memref<1x3x4x128xf32, #tpu.memory_space<vmem>>, vector<1x1x1x128xf32>,
    %cst_12 = arith.constant 0.000000e+00 : f32
    %20 = vector.broadcast %cst_12 : f32 to vector<2x2x128xf32>
    %21 = arith.select %12, %8, %20 : vector<2x2x128xi1>, vector<2x2x128xf32>
    %cst_13 = arith.constant dense<0.000000e+00> : vector<128xf32>
    %22 = vector.multi_reduction <add>, %21, %cst_13 [0, 1] : vector<2x2x128xf32> to vector<128xf32>
    %c0_14 = arith.constant 0 : index
    %c1 = arith.constant 1 : index
    %c0_15 = arith.constant 0 : index
    %c0_16 = arith.constant 0 : index
    %23 = vector.load %arg3[%c0_14, %c1, %c0_15, %c0_16] : memref<1x3x4x128xf32, #tpu.memory_space<vmem>>, vector<1x1x1x128xf32>
    %24 = vector.shape_cast %23 : vector<1x1x1x128xf32> to vector<128xf32>
    %25 = vector.shape_cast %22 : vector<128xf32> to vector<1x1x1x128xf32>
    tpu.vector_store %arg3[%c0_14, %c1, %c0_15, %c0_16], %25 {strides = array<i32>} : memref<1x3x4x128xf32, #tpu.memory_space<vmem>>, vector<1x1x1x128xf32>,
    %26 = arith.mulf %10, %13 : vector<2x2x128xf32>
    %cst_17 = arith.constant dense<0.000000e+00> : vector<128xf32>
    %27 = vector.multi_reduction <add>, %26, %cst_17 [0, 1] : vector<2x2x128xf32> to vector<128xf32>
    %c0_18 = arith.constant 0 : index
    %c2 = arith.constant 2 : index
    %c0_19 = arith.constant 0 : index
    %c0_20 = arith.constant 0 : index
    %28 = vector.load %arg3[%c0_18, %c2, %c0_19, %c0_20] : memref<1x3x4x128xf32, #tpu.memory_space<vmem>>, vector<1x1x1x128xf32>
    %29 = vector.shape_cast %28 : vector<1x1x1x128xf32> to vector<128xf32>
    %30 = vector.shape_cast %27 : vector<128xf32> to vector<1x1x1x128xf32>
    tpu.vector_store %arg3[%c0_18, %c2, %c0_19, %c0_20], %30 {strides = array<i32>} : memref<1x3x4x128xf32, #tpu.memory_space<vmem>>, vector<1x1x1x128xf32>,
    %c0_21 = arith.constant 0 : index
    %c1_22 = arith.constant 1 : index
    %c0_23 = arith.constant 0 : index
    %c0_24 = arith.constant 0 : index
    %31 = vector.load %arg1[%c0_21, %c1_22, %c0_23, %c0_24] : memref<2x4x2x128xf32, #tpu.memory_space<vmem>>, vector<2x1x2x128xf32>
    %32 = vector.shape_cast %31 : vector<2x1x2x128xf32> to vector<2x2x128xf32>
    %c1_i32 = arith.constant 1 : i32
    %33 = vector.broadcast %c1_i32 : i32 to vector<2x2x128xi32>
    %34 = arith.cmpi eq, %0, %33 : vector<2x2x128xi32>
    %35 = arith.mulf %32, %8 : vector<2x2x128xf32>
    %cst_25 = arith.constant 0.000000e+00 : f32
    %36 = vector.broadcast %cst_25 : f32 to vector<2x2x128xf32>
    %37 = arith.select %34, %35, %36 : vector<2x2x128xi1>, vector<2x2x128xf32>
    %cst_26 = arith.constant dense<0.000000e+00> : vector<128xf32>
    %38 = vector.multi_reduction <add>, %37, %cst_26 [0, 1] : vector<2x2x128xf32> to vector<128xf32>
    %c0_27 = arith.constant 0 : index
    %c0_28 = arith.constant 0 : index
    %c1_29 = arith.constant 1 : index
    %c0_30 = arith.constant 0 : index
    %39 = vector.load %arg3[%c0_27, %c0_28, %c1_29, %c0_30] : memref<1x3x4x128xf32, #tpu.memory_space<vmem>>, vector<1x1x1x128xf32>
    %40 = vector.shape_cast %39 : vector<1x1x1x128xf32> to vector<128xf32>
    %41 = vector.shape_cast %38 : vector<128xf32> to vector<1x1x1x128xf32>
    tpu.vector_store %arg3[%c0_27, %c0_28, %c1_29, %c0_30], %41 {strides = array<i32>} : memref<1x3x4x128xf32, #tpu.memory_space<vmem>>, vector<1x1x1x128xf32>,
    %cst_31 = arith.constant 0.000000e+00 : f32
    %42 = vector.broadcast %cst_31 : f32 to vector<2x2x128xf32>
    %43 = arith.select %34, %8, %42 : vector<2x2x128xi1>, vector<2x2x128xf32>
    %cst_32 = arith.constant dense<0.000000e+00> : vector<128xf32>
    %44 = vector.multi_reduction <add>, %43, %cst_32 [0, 1] : vector<2x2x128xf32> to vector<128xf32>
    %c0_33 = arith.constant 0 : index
    %c1_34 = arith.constant 1 : index
    %c1_35 = arith.constant 1 : index
    %c0_36 = arith.constant 0 : index
    %45 = vector.load %arg3[%c0_33, %c1_34, %c1_35, %c0_36] : memref<1x3x4x128xf32, #tpu.memory_space<vmem>>, vector<1x1x1x128xf32>
    %46 = vector.shape_cast %45 : vector<1x1x1x128xf32> to vector<128xf32>
    %47 = vector.shape_cast %44 : vector<128xf32> to vector<1x1x1x128xf32>
    tpu.vector_store %arg3[%c0_33, %c1_34, %c1_35, %c0_36], %47 {strides = array<i32>} : memref<1x3x4x128xf32, #tpu.memory_space<vmem>>, vector<1x1x1x128xf32>,
    %48 = arith.mulf %32, %35 : vector<2x2x128xf32>
    %cst_37 = arith.constant dense<0.000000e+00> : vector<128xf32>
    %49 = vector.multi_reduction <add>, %48, %cst_37 [0, 1] : vector<2x2x128xf32> to vector<128xf32>
    %c0_38 = arith.constant 0 : index
    %c2_39 = arith.constant 2 : index
    %c1_40 = arith.constant 1 : index
    %c0_41 = arith.constant 0 : index
    %50 = vector.load %arg3[%c0_38, %c2_39, %c1_40, %c0_41] : memref<1x3x4x128xf32, #tpu.memory_space<vmem>>, vector<1x1x1x128xf32>
    %51 = vector.shape_cast %50 : vector<1x1x1x128xf32> to vector<128xf32>
    %52 = vector.shape_cast %49 : vector<128xf32> to vector<1x1x1x128xf32>
    tpu.vector_store %arg3[%c0_38, %c2_39, %c1_40, %c0_41], %52 {strides = array<i32>} : memref<1x3x4x128xf32, #tpu.memory_space<vmem>>, vector<1x1x1x128xf32>,
    %c0_42 = arith.constant 0 : index
    %c2_43 = arith.constant 2 : index
    %c0_44 = arith.constant 0 : index
    %c0_45 = arith.constant 0 : index
    %53 = vector.load %arg1[%c0_42, %c2_43, %c0_44, %c0_45] : memref<2x4x2x128xf32, #tpu.memory_space<vmem>>, vector<2x1x2x128xf32>
    %54 = vector.shape_cast %53 : vector<2x1x2x128xf32> to vector<2x2x128xf32>
    %c2_i32 = arith.constant 2 : i32
    %55 = vector.broadcast %c2_i32 : i32 to vector<2x2x128xi32>
    %56 = arith.cmpi eq, %0, %55 : vector<2x2x128xi32>
    %57 = arith.mulf %54, %8 : vector<2x2x128xf32>
    %cst_46 = arith.constant 0.000000e+00 : f32
    %58 = vector.broadcast %cst_46 : f32 to vector<2x2x128xf32>
    %59 = arith.select %56, %57, %58 : vector<2x2x128xi1>, vector<2x2x128xf32>
    %cst_47 = arith.constant dense<0.000000e+00> : vector<128xf32>
    %60 = vector.multi_reduction <add>, %59, %cst_47 [0, 1] : vector<2x2x128xf32> to vector<128xf32>
    %c0_48 = arith.constant 0 : index
    %c0_49 = arith.constant 0 : index
    %c2_50 = arith.constant 2 : index
    %c0_51 = arith.constant 0 : index
    %61 = vector.load %arg3[%c0_48, %c0_49, %c2_50, %c0_51] : memref<1x3x4x128xf32, #tpu.memory_space<vmem>>, vector<1x1x1x128xf32>
    %62 = vector.shape_cast %61 : vector<1x1x1x128xf32> to vector<128xf32>
    %63 = vector.shape_cast %60 : vector<128xf32> to vector<1x1x1x128xf32>
    tpu.vector_store %arg3[%c0_48, %c0_49, %c2_50, %c0_51], %63 {strides = array<i32>} : memref<1x3x4x128xf32, #tpu.memory_space<vmem>>, vector<1x1x1x128xf32>,
    %cst_52 = arith.constant 0.000000e+00 : f32
    %64 = vector.broadcast %cst_52 : f32 to vector<2x2x128xf32>
    %65 = arith.select %56, %8, %64 : vector<2x2x128xi1>, vector<2x2x128xf32>
    %cst_53 = arith.constant dense<0.000000e+00> : vector<128xf32>
    %66 = vector.multi_reduction <add>, %65, %cst_53 [0, 1] : vector<2x2x128xf32> to vector<128xf32>
    %c0_54 = arith.constant 0 : index
    %c1_55 = arith.constant 1 : index
    %c2_56 = arith.constant 2 : index
    %c0_57 = arith.constant 0 : index
    %67 = vector.load %arg3[%c0_54, %c1_55, %c2_56, %c0_57] : memref<1x3x4x128xf32, #tpu.memory_space<vmem>>, vector<1x1x1x128xf32>
    %68 = vector.shape_cast %67 : vector<1x1x1x128xf32> to vector<128xf32>
    %69 = vector.shape_cast %66 : vector<128xf32> to vector<1x1x1x128xf32>
    tpu.vector_store %arg3[%c0_54, %c1_55, %c2_56, %c0_57], %69 {strides = array<i32>} : memref<1x3x4x128xf32, #tpu.memory_space<vmem>>, vector<1x1x1x128xf32>,
    %70 = arith.mulf %54, %57 : vector<2x2x128xf32>
    %cst_58 = arith.constant dense<0.000000e+00> : vector<128xf32>
    %71 = vector.multi_reduction <add>, %70, %cst_58 [0, 1] : vector<2x2x128xf32> to vector<128xf32>
    %c0_59 = arith.constant 0 : index
    %c2_60 = arith.constant 2 : index
    %c2_61 = arith.constant 2 : index
    %c0_62 = arith.constant 0 : index
    %72 = vector.load %arg3[%c0_59, %c2_60, %c2_61, %c0_62] : memref<1x3x4x128xf32, #tpu.memory_space<vmem>>, vector<1x1x1x128xf32>
    %73 = vector.shape_cast %72 : vector<1x1x1x128xf32> to vector<128xf32>
    %74 = vector.shape_cast %71 : vector<128xf32> to vector<1x1x1x128xf32>
    tpu.vector_store %arg3[%c0_59, %c2_60, %c2_61, %c0_62], %74 {strides = array<i32>} : memref<1x3x4x128xf32, #tpu.memory_space<vmem>>, vector<1x1x1x128xf32>,
    %c0_63 = arith.constant 0 : index
    %c3 = arith.constant 3 : index
    %c0_64 = arith.constant 0 : index
    %c0_65 = arith.constant 0 : index
    %75 = vector.load %arg1[%c0_63, %c3, %c0_64, %c0_65] : memref<2x4x2x128xf32, #tpu.memory_space<vmem>>, vector<2x1x2x128xf32>
    %76 = vector.shape_cast %75 : vector<2x1x2x128xf32> to vector<2x2x128xf32>
    %c3_i32 = arith.constant 3 : i32
    %77 = vector.broadcast %c3_i32 : i32 to vector<2x2x128xi32>
    %78 = arith.cmpi eq, %0, %77 : vector<2x2x128xi32>
    %79 = arith.mulf %76, %8 : vector<2x2x128xf32>
    %cst_66 = arith.constant 0.000000e+00 : f32
    %80 = vector.broadcast %cst_66 : f32 to vector<2x2x128xf32>
    %81 = arith.select %78, %79, %80 : vector<2x2x128xi1>, vector<2x2x128xf32>
    %cst_67 = arith.constant dense<0.000000e+00> : vector<128xf32>
    %82 = vector.multi_reduction <add>, %81, %cst_67 [0, 1] : vector<2x2x128xf32> to vector<128xf32>
    %c0_68 = arith.constant 0 : index
    %c0_69 = arith.constant 0 : index
    %c3_70 = arith.constant 3 : index
    %c0_71 = arith.constant 0 : index
    %83 = vector.load %arg3[%c0_68, %c0_69, %c3_70, %c0_71] : memref<1x3x4x128xf32, #tpu.memory_space<vmem>>, vector<1x1x1x128xf32>
    %84 = vector.shape_cast %83 : vector<1x1x1x128xf32> to vector<128xf32>
    %85 = vector.shape_cast %82 : vector<128xf32> to vector<1x1x1x128xf32>
    tpu.vector_store %arg3[%c0_68, %c0_69, %c3_70, %c0_71], %85 {strides = array<i32>} : memref<1x3x4x128xf32, #tpu.memory_space<vmem>>, vector<1x1x1x128xf32>,
    %cst_72 = arith.constant 0.000000e+00 : f32
    %86 = vector.broadcast %cst_72 : f32 to vector<2x2x128xf32>
    %87 = arith.select %78, %8, %86 : vector<2x2x128xi1>, vector<2x2x128xf32>
    %cst_73 = arith.constant dense<0.000000e+00> : vector<128xf32>
    %88 = vector.multi_reduction <add>, %87, %cst_73 [0, 1] : vector<2x2x128xf32> to vector<128xf32>
    %c0_74 = arith.constant 0 : index
    %c1_75 = arith.constant 1 : index
    %c3_76 = arith.constant 3 : index
    %c0_77 = arith.constant 0 : index
    %89 = vector.load %arg3[%c0_74, %c1_75, %c3_76, %c0_77] : memref<1x3x4x128xf32, #tpu.memory_space<vmem>>, vector<1x1x1x128xf32>
    %90 = vector.shape_cast %89 : vector<1x1x1x128xf32> to vector<128xf32>
    %91 = vector.shape_cast %88 : vector<128xf32> to vector<1x1x1x128xf32>
    tpu.vector_store %arg3[%c0_74, %c1_75, %c3_76, %c0_77], %91 {strides = array<i32>} : memref<1x3x4x128xf32, #tpu.memory_space<vmem>>, vector<1x1x1x128xf32>,
    %92 = arith.mulf %76, %79 : vector<2x2x128xf32>
    %cst_78 = arith.constant dense<0.000000e+00> : vector<128xf32>
    %93 = vector.multi_reduction <add>, %92, %cst_78 [0, 1] : vector<2x2x128xf32> to vector<128xf32>
    %c0_79 = arith.constant 0 : index
    %c2_80 = arith.constant 2 : index
    %c3_81 = arith.constant 3 : index
    %c0_82 = arith.constant 0 : index
    %94 = vector.load %arg3[%c0_79, %c2_80, %c3_81, %c0_82] : memref<1x3x4x128xf32, #tpu.memory_space<vmem>>, vector<1x1x1x128xf32>
    %95 = vector.shape_cast %94 : vector<1x1x1x128xf32> to vector<128xf32>
    %96 = vector.shape_cast %93 : vector<128xf32> to vector<1x1x1x128xf32>
    tpu.vector_store %arg3[%c0_79, %c2_80, %c3_81, %c0_82], %96 {strides = array<i32>} : memref<1x3x4x128xf32, #tpu.memory_space<vmem>>, vector<1x1x1x128xf32>,
    return
  }
  func.func @transform_0(%arg0: i32) -> (i32, i32, i32, i32) {
    %c0_i32 = arith.constant 0 : i32
    %c0_i32_0 = arith.constant 0 : i32
    %c0_i32_1 = arith.constant 0 : i32
    %c0_i32_2 = arith.constant 0 : i32
    return %c0_i32, %c0_i32_0, %arg0, %c0_i32_1 : i32, i32, i32, i32
  }
  func.func @transform_1(%arg0: i32) -> (i32, i32, i32) {
    %c0_i32 = arith.constant 0 : i32
    %c0_i32_0 = arith.constant 0 : i32
    %c0_i32_1 = arith.constant 0 : i32
    return %c0_i32, %arg0, %c0_i32_0 : i32, i32, i32
  }
  func.func @transform_2(%arg0: i32) -> (i32, i32, i32, i32) {
    %c0_i32 = arith.constant 0 : i32
    %c0_i32_0 = arith.constant 0 : i32
    %c0_i32_1 = arith.constant 0 : i32
    %c0_i32_2 = arith.constant 0 : i32
    return %arg0, %c0_i32, %c0_i32_0, %c0_i32_1 : i32, i32, i32, i32
  }
}

</mosaic_0001>

<llo_original>
// kernel: tpu_custom_call.1
$region0: #{tpu_custom_call.1}
  #allocation0 [shape = 'u32[]', space=smem, size = 0x4, offset = 0x4, fixed_abs, tag = 'smem constant byte address 0x4 - core index']
  #allocation1 [shape = 'u32[72,128]{1,0:T(1,128)}', space=vmem, size = 0x9000, scoped, tag = 'internal scratch']
  %s0 = inlined_call_operand.hbm [shape: f32[2,4,2,128], index: 0, kind: input, shape index: {}]
  %s1 = inlined_call_operand.hbm [shape: s32[2,2,128], index: 1, kind: input, shape index: {}]
  %s2 = inlined_call_operand.hbm [shape: f32[1,3,4,128], index: 2, kind: output, shape index: {}]
  %s3 = sld [smem:[#allocation0]]
  $region26: #{tpu_custom_call.1} parent=0
    _
  %s5 = ssub.s32 1, %s3
  %s6 = scalar_select 0, %s5, %s3
  $region1: #{tpu_custom_call.1} parent=0
    #allocation2 [shape = 'u8[8192]{0}', space=vmem, size = 0x2000, scoped, tag = 'input window, operand 0, single buffered']
    #allocation3 [shape = 's32[1]{0}', space=sflag, size = 0x4, scoped, tag = 'scoped memory for tpu_custom_call.1']
    #allocation4 [shape = 's32[1]{0}', space=sflag, size = 0x4, scoped, tag = 'scoped memory for tpu_custom_call.1']
    #allocation5 [shape = 'u8[2048]{0}', space=vmem, size = 0x800, scoped, tag = 'input window, operand 1, single buffered']
    #allocation6 [shape = 's32[1]{0}', space=sflag, size = 0x4, scoped, tag = 'scoped memory for tpu_custom_call.1']
    #allocation7 [shape = 'u8[6144]{0}', space=vmem, size = 0x1800, scoped, tag = 'output window, operand 0, single buffered']
    %7 = vsyncpa [#allocation3], 0
    %8 = vsyncpa [#allocation6], 0
    %9 = vsyncpa [#allocation4], 0
    // Predicated region
    $region2: #{tpu_custom_call.1} parent=1 // pred_check
      _
    $region3: #{tpu_custom_call.1} parent=1 // pred_check_branch
      %11 = sbr.rel (0) target = $region5
    $region4: #{tpu_custom_call.1} parent=1 // pred_region
      %13 = vsyncadd [#allocation3], 0
      %s14 = sshll.u32 %s0, 4
      %s15 = int_to_ptr.hbm [resolvable:$true] %s14
      %s16 = sshll.u32 [#allocation2], 4
      %s17 = int_to_ptr.vmem [resolvable:$true] %s16
      %22 = dma.hbm_to_vmem [thread:$0]  %s15, 256, %s17, [#allocation3], 32, 32, 2
    $region5: #{tpu_custom_call.1} parent=1 // pred_fallthru
      _
    // Predicated region
    $region6: #{tpu_custom_call.1} parent=1 // pred_check
      _
    $region7: #{tpu_custom_call.1} parent=1 // pred_check_branch
      %24 = sbr.rel (0) target = $region9
    $region8: #{tpu_custom_call.1} parent=1 // pred_region
      %26 = vsyncadd [#allocation6], 0
      %s27 = sshll.u32 %s1, 4
      %s28 = int_to_ptr.hbm [resolvable:$true] %s27
      %s29 = sshll.u32 [#allocation5], 4
      %s30 = int_to_ptr.vmem [resolvable:$true] %s29
      %35 = dma.hbm_to_vmem [thread:$0]  %s28, 64, %s30, [#allocation6], 32, 32, 2
    $region9: #{tpu_custom_call.1} parent=1 // pred_fallthru
      _
    // Predicated region
    $region10: #{tpu_custom_call.1} parent=1 // pred_check
      _
    $region11: #{tpu_custom_call.1} parent=1 // pred_check_branch
      %37 = sbr.rel (0) target = $region13
    $region12: #{tpu_custom_call.1} parent=1 // pred_region
      %39 = dma.done [#allocation3], 256
    $region13: #{tpu_custom_call.1} parent=1 // pred_fallthru
      _
    // Predicated region
    $region14: #{tpu_custom_call.1} parent=1 // pred_check
      _
    $region15: #{tpu_custom_call.1} parent=1 // pred_check_branch
      %41 = sbr.rel (0) target = $region17
    $region16: #{tpu_custom_call.1} parent=1 // pred_region
      %43 = dma.done [#allocation6], 64
    $region17: #{tpu_custom_call.1} parent=1 // pred_fallthru
      _
    %v44 = vld [vmem:[#allocation5] sm:$0x3]
    %v45 = vld [vmem:[#allocation5 + $0x2] sm:$0x3]
    %vm46 = vcmp.ne.s32.totalorder %v44, 255
    %vm47 = vcmp.ne.s32.totalorder %v45, 255
    %v48 = vsel %vm46, 1, 0
    %v49 = vsel %vm47, 1, 0
    %v50 = vcvt.s32.f32 %v48
    %v51 = vcvt.s32.f32 %v49
    %vm52 = vcmask 1041408
    %v53 = vsel %vm52, %v50, 0.0
    %v54 = vsel %vm52, %v51, 0.0
    %v55 = vadd.f32 %v53, %v54
    %v56 = vld [vmem:[#allocation2] sm:$0x3]
    %v57 = vld [vmem:[#allocation2 + $0x8] sm:$0x3]
    %vm58 = vcmp.eq.s32.totalorder %v44, 0
    %vm59 = vcmp.eq.s32.totalorder %v45, 0
    %v60 = vmul.f32 %v56, %v55
    %v61 = vmul.f32 %v57, %v55
    %v62 = vsel %vm58, %v60, 0.0
    %v63 = vsel %vm59, %v61, 0.0
    %v64 = vsel %vm52, %v62, 0.0
    %v65 = vsel %vm52, %v63, 0.0
    %v66 = vadd.f32 %v64, %v65
    %v67 = vrot.slane %v66, 4
    %v68 = vadd.f32 %v66, %v67
    %v69 = vrot.slane %v68, 2
    %v70 = vadd.f32 %v68, %v69
    %v71 = vrot.slane %v70, 1
    %v72 = vadd.f32 %v70, %v71
    %73 = vst [vmem:[#allocation7] sm:$0x1] %v72
    %v74 = vsel %vm58, %v55, 0.0
    %v75 = vsel %vm59, %v55, 0.0
    %v76 = vsel %vm52, %v74, 0.0
    %v77 = vsel %vm52, %v75, 0.0
    %v78 = vadd.f32 %v76, %v77
    %v79 = vrot.slane %v78, 4
    %v80 = vadd.f32 %v78, %v79
    %v81 = vrot.slane %v80, 2
    %v82 = vadd.f32 %v80, %v81
    %v83 = vrot.slane %v82, 1
    %v84 = vadd.f32 %v82, %v83
    %s85 = scalar_lea.vmem [#allocation7], 4
    %86 = vst [vmem:[%s85] sm:$0x1] %v84
    %v87 = vmul.f32 %v56, %v60
    %v88 = vmul.f32 %v57, %v61
    %v89 = vsel %vm52, %v87, 0.0
    %v90 = vsel %vm52, %v88, 0.0
    %v91 = vadd.f32 %v89, %v90
    %v92 = vrot.slane %v91, 4
    %v93 = vadd.f32 %v91, %v92
    %v94 = vrot.slane %v93, 2
    %v95 = vadd.f32 %v93, %v94
    %v96 = vrot.slane %v95, 1
    %v97 = vadd.f32 %v95, %v96
    %s98 = scalar_lea.vmem [#allocation7], 8
    %99 = vst [vmem:[%s98] sm:$0x1] %v97
    %s100 = scalar_lea.vmem [#allocation2], 2
    %v101 = vld [vmem:[%s100] sm:$0x3]
    %v102 = vld [vmem:[%s100 + $0x8] sm:$0x3]
    %vm103 = vcmp.eq.s32.totalorder %v44, 1
    %vm104 = vcmp.eq.s32.totalorder %v45, 1
    %v105 = vmul.f32 %v101, %v55
    %v106 = vmul.f32 %v102, %v55
    %v107 = vsel %vm103, %v105, 0.0
    %v108 = vsel %vm104, %v106, 0.0
    %v109 = vsel %vm52, %v107, 0.0
    %v110 = vsel %vm52, %v108, 0.0
    %v111 = vadd.f32 %v109, %v110
    %v112 = vrot.slane %v111, 4
    %v113 = vadd.f32 %v111, %v112
    %v114 = vrot.slane %v113, 2
    %v115 = vadd.f32 %v113, %v114
    %v116 = vrot.slane %v115, 1
    %v117 = vadd.f32 %v115, %v116
    %118 = vst [vmem:[#allocation7 + $0x1] sm:$0x1] %v117
    %v119 = vsel %vm103, %v55, 0.0
    %v120 = vsel %vm104, %v55, 0.0
    %v121 = vsel %vm52, %v119, 0.0
    %v122 = vsel %vm52, %v120, 0.0
    %v123 = vadd.f32 %v121, %v122
    %v124 = vrot.slane %v123, 4
    %v125 = vadd.f32 %v123, %v124
    %v126 = vrot.slane %v125, 2
    %v127 = vadd.f32 %v125, %v126
    %v128 = vrot.slane %v127, 1
    %v129 = vadd.f32 %v127, %v128
    %130 = vst [vmem:[%s85 + $0x1] sm:$0x1] %v129
    %v131 = vmul.f32 %v101, %v105
    %v132 = vmul.f32 %v102, %v106
    %v133 = vsel %vm52, %v131, 0.0
    %v134 = vsel %vm52, %v132, 0.0
    %v135 = vadd.f32 %v133, %v134
    %v136 = vrot.slane %v135, 4
    %v137 = vadd.f32 %v135, %v136
    %v138 = vrot.slane %v137, 2
    %v139 = vadd.f32 %v137, %v138
    %v140 = vrot.slane %v139, 1
    %v141 = vadd.f32 %v139, %v140
    %142 = vst [vmem:[%s98 + $0x1] sm:$0x1] %v141
    %s143 = scalar_lea.vmem [#allocation2], 4
    %v144 = vld [vmem:[%s143] sm:$0x3]
    %v145 = vld [vmem:[%s143 + $0x8] sm:$0x3]
    %vm146 = vcmp.eq.s32.totalorder %v44, 2
    %vm147 = vcmp.eq.s32.totalorder %v45, 2
    %v148 = vmul.f32 %v144, %v55
    %v149 = vmul.f32 %v145, %v55
    %v150 = vsel %vm146, %v148, 0.0
    %v151 = vsel %vm147, %v149, 0.0
    %v152 = vsel %vm52, %v150, 0.0
    %v153 = vsel %vm52, %v151, 0.0
    %v154 = vadd.f32 %v152, %v153
    %v155 = vrot.slane %v154, 4
    %v156 = vadd.f32 %v154, %v155
    %v157 = vrot.slane %v156, 2
    %v158 = vadd.f32 %v156, %v157
    %v159 = vrot.slane %v158, 1
    %v160 = vadd.f32 %v158, %v159
    %161 = vst [vmem:[#allocation7 + $0x2] sm:$0x1] %v160
    %v162 = vsel %vm146, %v55, 0.0
    %v163 = vsel %vm147, %v55, 0.0
    %v164 = vsel %vm52, %v162, 0.0
    %v165 = vsel %vm52, %v163, 0.0
    %v166 = vadd.f32 %v164, %v165
    %v167 = vrot.slane %v166, 4
    %v168 = vadd.f32 %v166, %v167
    %v169 = vrot.slane %v168, 2
    %v170 = vadd.f32 %v168, %v169
    %v171 = vrot.slane %v170, 1
    %v172 = vadd.f32 %v170, %v171
    %173 = vst [vmem:[%s85 + $0x2] sm:$0x1] %v172
    %v174 = vmul.f32 %v144, %v148
    %v175 = vmul.f32 %v145, %v149
    %v176 = vsel %vm52, %v174, 0.0
    %v177 = vsel %vm52, %v175, 0.0
    %v178 = vadd.f32 %v176, %v177
    %v179 = vrot.slane %v178, 4
    %v180 = vadd.f32 %v178, %v179
    %v181 = vrot.slane %v180, 2
    %v182 = vadd.f32 %v180, %v181
    %v183 = vrot.slane %v182, 1
    %v184 = vadd.f32 %v182, %v183
    %185 = vst [vmem:[%s98 + $0x2] sm:$0x1] %v184
    %s186 = scalar_lea.vmem [#allocation2], 6
    %v187 = vld [vmem:[%s186] sm:$0x3]
    %v188 = vld [vmem:[%s186 + $0x8] sm:$0x3]
    %vm189 = vcmp.eq.s32.totalorder %v44, 3
    %vm190 = vcmp.eq.s32.totalorder %v45, 3
    %v191 = vmul.f32 %v187, %v55
    %v192 = vmul.f32 %v188, %v55
    %v193 = vsel %vm189, %v191, 0.0
    %v194 = vsel %vm190, %v192, 0.0
    %v195 = vsel %vm52, %v193, 0.0
    %v196 = vsel %vm52, %v194, 0.0
    %v197 = vadd.f32 %v195, %v196
    %v198 = vrot.slane %v197, 4
    %v199 = vadd.f32 %v197, %v198
    %v200 = vrot.slane %v199, 2
    %v201 = vadd.f32 %v199, %v200
    %v202 = vrot.slane %v201, 1
    %v203 = vadd.f32 %v201, %v202
    %204 = vst [vmem:[#allocation7 + $0x3] sm:$0x1] %v203
    %v205 = vsel %vm189, %v55, 0.0
    %v206 = vsel %vm190, %v55, 0.0
    %v207 = vsel %vm52, %v205, 0.0
    %v208 = vsel %vm52, %v206, 0.0
    %v209 = vadd.f32 %v207, %v208
    %v210 = vrot.slane %v209, 4
    %v211 = vadd.f32 %v209, %v210
    %v212 = vrot.slane %v211, 2
    %v213 = vadd.f32 %v211, %v212
    %v214 = vrot.slane %v213, 1
    %v215 = vadd.f32 %v213, %v214
    %216 = vst [vmem:[%s85 + $0x3] sm:$0x1] %v215
    %v217 = vmul.f32 %v187, %v191
    %v218 = vmul.f32 %v188, %v192
    %v219 = vsel %vm52, %v217, 0.0
    %v220 = vsel %vm52, %v218, 0.0
    %v221 = vadd.f32 %v219, %v220
    %v222 = vrot.slane %v221, 4
    %v223 = vadd.f32 %v221, %v222
    %v224 = vrot.slane %v223, 2
    %v225 = vadd.f32 %v223, %v224
    %v226 = vrot.slane %v225, 1
    %v227 = vadd.f32 %v225, %v226
    %228 = vst [vmem:[%s98 + $0x3] sm:$0x1] %v227
    // Predicated region
    $region18: #{tpu_custom_call.1} parent=1 // pred_check
      _
    $region19: #{tpu_custom_call.1} parent=1 // pred_check_branch
      %230 = sbr.rel (0) target = $region21
    $region20: #{tpu_custom_call.1} parent=1 // pred_region
      %232 = vsyncadd [#allocation4], 0
      %s233 = sshll.u32 [#allocation7], 4
      %s234 = int_to_ptr.vmem [resolvable:$true] %s233
      %s235 = sshll.u32 %s2, 4
      %s236 = int_to_ptr.hbm [resolvable:$true] %s235
      %241 = dma.vmem_to_hbm [thread:$0]  %s234, 192, %s236, [#allocation4], 64, 64, 4
    $region21: #{tpu_custom_call.1} parent=1 // pred_fallthru
      _
    // Predicated region
    $region22: #{tpu_custom_call.1} parent=1 // pred_check
      _
    $region23: #{tpu_custom_call.1} parent=1 // pred_check_branch
      %243 = sbr.rel (0) target = $region25
    $region24: #{tpu_custom_call.1} parent=1 // pred_region
      %245 = dma.done [#allocation4], 192
    $region25: #{tpu_custom_call.1} parent=1 // pred_fallthru
      _
    %246 = vsyncpa [#allocation3], 1
    %247 = vsyncpa [#allocation6], 1
    %248 = vsyncpa [#allocation4], 1

</llo_original>
